<compile_context>
chip_gen: v7x
topology: tpu7x:2x2x1
jax: 0.10.0
libtpu: 0.0.40
codegen_flags: <defaults>
</compile_context>

<pallas_src>
import functools

import jax
import jax.numpy as jnp
from jax.experimental import pallas as pl
from jax.experimental.pallas import tpu as pltpu


def _bottleneck_kernel(x_ref, yi_ref, xi_ref, s1_ref, o1_ref, w1_ref, b1_ref,
                       w2_ref, b2_ref, w3_ref, b3_ref, out_ref, taps_ref,
                       *, height, width, planes, dot_dtype):
    """One batch group. C = inplanes, P = planes, F = bb * padded(H*W).

    x_ref  : (1, C, F)          out_ref : (1, C, F)
    yi, xi : (1, F)             (row / col index of each lane; pad = -1e6)
    s1, o1 : (C, 1)             (folded bn1 scale / offset)
    w1, b1 : (P, C), (P, 1)     (conv1 with bn2 folded in)
    w2, b2 : (P, 9P), (P, 1)    (conv2 taps stacked along K, bn3 folded in)
    w3, b3 : (C, P), (C, 1)     (conv3)
    taps   : (9P, F) VMEM scratch
    """
    f_block = x_ref.shape[-1]
    x = x_ref[0]                                              # (C, F)

    # --- bn1 + relu (folded per-channel scale/offset) ---
    h = jnp.maximum(x * s1_ref[...] + o1_ref[...], 0.0)

    # --- conv1 (1x1) [+ folded bn2] + relu ---
    h = jnp.dot(w1_ref[...], h.astype(dot_dtype),
                preferred_element_type=jnp.float32) + b1_ref[...]
    h = jnp.maximum(h, 0.0)                                   # (P, F) f32

    # --- conv2 (3x3, pad 1) [+ folded bn3] + relu ---
    # Stack the center tap and the 8 lane-rolled, border-masked taps into the
    # (9P, F) scratch, then contract with a single K = 9P matmul.
    yi = yi_ref[...]                                          # (1, F)
    xi = xi_ref[...]                                          # (1, F)
    for dy in range(3):
        for dx in range(3):
            t = dy * 3 + dx
            off = (dy - 1) * width + (dx - 1)
            if off == 0:
                tap = h                                       # center tap
            else:
                valid = ((yi >= float(1 - dy)) & (yi <= float(height - dy)) &
                         (xi >= float(1 - dx)) & (xi <= float(width - dx)))
                tap = (pltpu.roll(h, shift=(-off) % f_block, axis=1)
                       * valid.astype(jnp.float32))
            taps_ref[t * planes:(t + 1) * planes, :] = tap.astype(taps_ref.dtype)
    h = jnp.dot(w2_ref[...], taps_ref[...],
                preferred_element_type=jnp.float32) + b2_ref[...]
    h = jnp.maximum(h, 0.0)                                   # (P, F)

    # --- conv3 (1x1) ---
    h = jnp.dot(w3_ref[...], h.astype(dot_dtype),
                preferred_element_type=jnp.float32) + b3_ref[...]

    # --- residual add (stride == 1, downsample is None, 2*P == C) ---
    out_ref[0] = h + x_ref[0]


def _fold_params(p, use_bf16, eps=1e-5):
    """Fold eval-mode BN into per-channel scale/offset and into conv weights."""
    def bn_fold(gamma, beta, mean, var):
        s = gamma / jnp.sqrt(var + eps)
        return s, beta - mean * s

    s1, o1 = bn_fold(*p["bn1"])
    s2, o2 = bn_fold(*p["bn2"])
    s3, o3 = bn_fold(*p["bn3"])

    planes = p["w1"].shape[0]
    wdt = jnp.bfloat16 if use_bf16 else jnp.float32

    # bn2 folded into conv1 (scales conv1's output channels).
    w1f = (p["w1"] * s2[:, None]).astype(wdt)                 # (P, C)
    b1f = (p["b1"] * s2 + o2)[:, None]                        # (P, 1)

    # bn3 folded into conv2; stack the 9 taps: k = (dy*3 + dx) * P + c_in.
    w2 = p["w2"] * s3[:, None, None, None]                    # (P, P, 3, 3)
    w2s = jnp.transpose(w2, (0, 2, 3, 1)).reshape(planes, 9 * planes).astype(wdt)
    b2f = (p["b2"] * s3 + o3)[:, None]                        # (P, 1)

    return dict(s1=s1[:, None], o1=o1[:, None],
                w1=w1f, b1=b1f, w2=w2s, b2=b2f,
                w3=p["w3"].astype(wdt), b3=p["b3"][:, None])


def _choose_batch_block(n, f_pad, target_lanes=512):
    """Largest batch group reaching ~target_lanes lanes while leaving >= 2
    grid steps whenever n >= 2 (keeps both v7x TensorCores busy)."""
    max_bb = 1 if n < 2 else n // 2
    best = 1
    for bb in range(1, max(1, max_bb) + 1):
        if n % bb == 0:
            best = bb
            if bb * f_pad >= target_lanes:
                break
    return best


@functools.partial(jax.jit, static_argnames=("use_bf16",))
def bottleneck_forward(x_nchw, params, use_bf16=False):
    """x_nchw: (N, inplanes, H, W) float32 -> (N, 2*planes, H, W) float32."""
    N, C, H, W = x_nchw.shape
    planes = params["w1"].shape[0]
    assert C == 2 * planes, "residual add requires inplanes == planes * expansion"
    f = H * W
    f_pad = ((f + 127) // 128) * 128                          # lane-dense spatial dim
    bb = _choose_batch_block(N, f_pad)
    G = N // bb
    f_block = bb * f_pad
    dot_dtype = jnp.bfloat16 if use_bf16 else jnp.float32

    kp = _fold_params(params, use_bf16)

    # (N, C, H, W) -> (G, C, bb * f_pad): channel-first, batch folded into lanes.
    x = x_nchw.reshape(N, C, f).astype(jnp.float32)
    if f_pad != f:
        x = jnp.pad(x, ((0, 0), (0, 0), (0, f_pad - f)))
    if bb > 1:
        x = x.reshape(G, bb, C, f_pad).transpose(0, 2, 1, 3)
    x = x.reshape(G, C, f_block)

    # Row / col index of every lane position; padded lanes marked invalid so
    # every border mask rejects them.
    idx = jnp.arange(f_pad, dtype=jnp.int32)
    in_img = idx < f
    y1 = jnp.where(in_img, idx // W, -(10 ** 6)).astype(jnp.float32)
    x1 = jnp.where(in_img, idx % W, -(10 ** 6)).astype(jnp.float32)
    yi = jnp.tile(y1, bb).reshape(1, f_block)
    xi = jnp.tile(x1, bb).reshape(1, f_block)

    consts = [kp["s1"], kp["o1"], kp["w1"], kp["b1"],
              kp["w2"], kp["b2"], kp["w3"], kp["b3"]]

    def _const_map(ndim):
        return lambda g: (0,) * ndim

    in_specs = [pl.BlockSpec((1, C, f_block), lambda g: (g, 0, 0)),
                pl.BlockSpec((1, f_block), _const_map(2)),
                pl.BlockSpec((1, f_block), _const_map(2))]
    in_specs += [pl.BlockSpec(a.shape, _const_map(a.ndim)) for a in consts]

    # Advisory cost estimate so XLA can schedule around the custom call.
    weight_bytes = sum(int(a.size) * a.dtype.itemsize for a in consts)
    flops = 2 * N * f * (planes * C + 9 * planes * planes + planes * C)
    ce = pl.CostEstimate(flops=flops, transcendentals=0,
                         bytes_accessed=2 * N * C * f * 4 + weight_bytes)

    # Explicit VMEM budget (default scoped limit is only 16 MiB on v5e):
    # double-buffered x/out blocks + taps scratch + weights, with headroom.
    block_bytes = (2 * 2 * C * f_block * 4
                   + 9 * planes * f_block * jnp.dtype(dot_dtype).itemsize
                   + 2 * weight_bytes + 2 * 2 * f_block * 4)
    vmem_limit = int(min(max(2 * block_bytes, 16 * 1024 * 1024), 48 * 1024 * 1024))

    out = pl.pallas_call(
        functools.partial(_bottleneck_kernel, height=H, width=W,
                          planes=planes, dot_dtype=dot_dtype),
        out_shape=jax.ShapeDtypeStruct((G, C, f_block), jnp.float32),
        grid_spec=pltpu.PrefetchScalarGridSpec(
            num_scalar_prefetch=0,
            grid=(G,),
            in_specs=in_specs,
            out_specs=pl.BlockSpec((1, C, f_block), lambda g: (g, 0, 0)),
            scratch_shapes=[pltpu.VMEM((9 * planes, f_block), dot_dtype)]),
        compiler_params=pltpu.CompilerParams(
            dimension_semantics=("parallel",),
            vmem_limit_bytes=vmem_limit),
        cost_estimate=ce,
    )(x, yi, xi, *consts)

    # Undo the batch/lane folding and the spatial padding.
    if bb > 1:
        out = out.reshape(G, C, bb, f_pad).transpose(0, 2, 1, 3)
    out = out.reshape(N, C, f_pad)[:, :, :f].reshape(N, C, H, W)
    return out


def make_params(key, inplanes, planes):
    """Deterministic parameters matching Bottleneck(inplanes, planes) shapes."""
    f32 = jnp.float32
    ks = jax.random.split(key, 18)

    def bn(kg, kb, km, kv, c):
        gamma = 1.0 + 0.1 * jax.random.normal(kg, (c,), f32)
        beta = 0.1 * jax.random.normal(kb, (c,), f32)
        mean = 0.1 * jax.random.normal(km, (c,), f32)
        var = 1.0 + 0.1 * jax.random.uniform(kv, (c,), f32)
        return (gamma, beta, mean, var)

    return dict(
        bn1=bn(ks[0], ks[1], ks[2], ks[3], inplanes),
        bn2=bn(ks[4], ks[5], ks[6], ks[7], planes),
        bn3=bn(ks[8], ks[9], ks[10], ks[11], planes),
        # conv1: (out, in) from PyTorch (planes, inplanes, 1, 1)
        w1=0.1 * jax.random.normal(ks[12], (planes, inplanes), f32),
        b1=0.05 * jax.random.normal(ks[13], (planes,), f32),
        # conv2: (out, in, kh, kw)
        w2=0.1 * jax.random.normal(ks[14], (planes, planes, 3, 3), f32),
        b2=0.05 * jax.random.normal(ks[15], (planes,), f32),
        # conv3: (out, in) from PyTorch (2*planes, planes, 1, 1)
        w3=0.1 * jax.random.normal(ks[16], (2 * planes, planes), f32),
        b3=0.05 * jax.random.normal(ks[17], (2 * planes,), f32),
    )


def bottleneck_ref(x, p, eps=1e-5):
    """Pure-JAX reference: unfolded eval-mode BN + convs in NCHW."""
    hi = jax.lax.Precision.HIGHEST

    def bn(v, stats):
        g, b, m, var = stats
        sh = (1, -1, 1, 1)
        return (v - m.reshape(sh)) * (g / jnp.sqrt(var + eps)).reshape(sh) + b.reshape(sh)

    N, C, H, W = x.shape
    h = jax.nn.relu(bn(x, p["bn1"]))
    h = jnp.einsum("nchw,oc->nohw", h, p["w1"], precision=hi) + p["b1"].reshape(1, -1, 1, 1)
    h = jax.nn.relu(bn(h, p["bn2"]))

    hp = jnp.pad(h, ((0, 0), (0, 0), (1, 1), (1, 1)))
    acc = jnp.zeros((N, p["w2"].shape[0], H, W), jnp.float32)
    for dy in range(3):
        for dx in range(3):
            acc = acc + jnp.einsum("nchw,oc->nohw",
                                   hp[:, :, dy:dy + H, dx:dx + W],
                                   p["w2"][:, :, dy, dx], precision=hi)
    h = acc + p["b2"].reshape(1, -1, 1, 1)
    h = jax.nn.relu(bn(h, p["bn3"]))
    h = jnp.einsum("nchw,oc->nohw", h, p["w3"], precision=hi) + p["b3"].reshape(1, -1, 1, 1)
    return h + x


if __name__ == "__main__":
    # Bottleneck(inplanes=8, planes=4, stride=1, downsample=None); expansion = 2.
    N, inplanes, planes, H, W = 2, 8, 4, 16, 16

    key = jax.random.PRNGKey(0)
    kx, kp = jax.random.split(key)
    x = jax.random.normal(kx, (N, inplanes, H, W), jnp.float32)
    params = make_params(kp, inplanes, planes)

    out = jax.block_until_ready(bottleneck_forward(x, params))
    ref = jax.block_until_ready(bottleneck_ref(x, params))

    assert out.shape == (N, planes * 2, H, W)
    err = float(jnp.max(jnp.abs(out - ref)))
    assert err < 5e-4, f"max abs err {err}"
    print("KERNEL_OK")
</pallas_src>

<mosaic_0001>
module attributes {stable_mosaic.version = 11 : i64} {
  func.func @_bottleneck_kernel(%arg0: i32, %arg1: memref<1x8x256xf32, #tpu.memory_space<vmem>>, %arg2: memref<1x256xf32, #tpu.memory_space<vmem>>, %arg3: memref<1x256xf32, #tpu.memory_space<vmem>>, %arg4: memref<8x1xf32, #tpu.memory_space<vmem>>, %arg5: memref<8x1xf32, #tpu.memory_space<vmem>>, %arg6: memref<4x8xf32, #tpu.memory_space<vmem>>, %arg7: memref<4x1xf32, #tpu.memory_space<vmem>>, %arg8: memref<4x36xf32, #tpu.memory_space<vmem>>, %arg9: memref<4x1xf32, #tpu.memory_space<vmem>>, %arg10: memref<8x4xf32, #tpu.memory_space<vmem>>, %arg11: memref<8x1xf32, #tpu.memory_space<vmem>>, %arg12: memref<1x8x256xf32, #tpu.memory_space<vmem>>, %arg13: memref<36x256xf32, #tpu.memory_space<vmem>>) attributes {dimension_semantics = [#tpu.dimension_semantics<parallel>], iteration_bounds = array<i64: 2>, scalar_prefetch = 0 : i64, scratch_operands = 1 : i64, tpu.core_type = #tpu.core_type<tc>, window_params = [{transform_indices = @transform_0, window_bounds = array<i64: 1, 8, 256>}, {pipeline_mode = #tpu.pipeline_mode<synchronous>, transform_indices = @transform_1, window_bounds = array<i64: 1, 256>}, {pipeline_mode = #tpu.pipeline_mode<synchronous>, transform_indices = @transform_2, window_bounds = array<i64: 1, 256>}, {pipeline_mode = #tpu.pipeline_mode<synchronous>, transform_indices = @transform_3, window_bounds = array<i64: 8, 1>}, {pipeline_mode = #tpu.pipeline_mode<synchronous>, transform_indices = @transform_4, window_bounds = array<i64: 8, 1>}, {pipeline_mode = #tpu.pipeline_mode<synchronous>, transform_indices = @transform_5, window_bounds = array<i64: 4, 8>}, {pipeline_mode = #tpu.pipeline_mode<synchronous>, transform_indices = @transform_6, window_bounds = array<i64: 4, 1>}, {pipeline_mode = #tpu.pipeline_mode<synchronous>, transform_indices = @transform_7, window_bounds = array<i64: 4, 36>}, {pipeline_mode = #tpu.pipeline_mode<synchronous>, transform_indices = @transform_8, window_bounds = array<i64: 4, 1>}, {pipeline_mode = #tpu.pipeline_mode<synchronous>, transform_indices = @transform_9, window_bounds = array<i64: 8, 4>}, {pipeline_mode = #tpu.pipeline_mode<synchronous>, transform_indices = @transform_10, window_bounds = array<i64: 8, 1>}, {transform_indices = @transform_11, window_bounds = array<i64: 1, 8, 256>}]} {
    %c0 = arith.constant 0 : index
    %c0_0 = arith.constant 0 : index
    %c0_1 = arith.constant 0 : index
    %0 = vector.load %arg1[%c0, %c0_0, %c0_1] : memref<1x8x256xf32, #tpu.memory_space<vmem>>, vector<1x8x256xf32>
    %1 = vector.shape_cast %0 : vector<1x8x256xf32> to vector<8x256xf32>
    %c0_2 = arith.constant 0 : index
    %c0_3 = arith.constant 0 : index
    %2 = vector.load %arg4[%c0_2, %c0_3] : memref<8x1xf32, #tpu.memory_space<vmem>>, vector<8x1xf32>
    %3 = vector.broadcast %2 : vector<8x1xf32> to vector<8x256xf32>
    %4 = arith.mulf %1, %3 : vector<8x256xf32>
    %c0_4 = arith.constant 0 : index
    %c0_5 = arith.constant 0 : index
    %5 = vector.load %arg5[%c0_4, %c0_5] : memref<8x1xf32, #tpu.memory_space<vmem>>, vector<8x1xf32>
    %6 = vector.broadcast %5 : vector<8x1xf32> to vector<8x256xf32>
    %7 = arith.addf %4, %6 : vector<8x256xf32>
    %cst = arith.constant 0.000000e+00 : f32
    %8 = vector.broadcast %cst : f32 to vector<8x256xf32>
    %9 = arith.maximumf %7, %8 : vector<8x256xf32>
    %c0_6 = arith.constant 0 : index
    %c0_7 = arith.constant 0 : index
    %10 = vector.load %arg6[%c0_6, %c0_7] : memref<4x8xf32, #tpu.memory_space<vmem>>, vector<4x8xf32>
    %cst_8 = arith.constant dense<0.000000e+00> : vector<4x256xf32>
    %11 = tpu.matmul %10, %9, %cst_8 {dimension_numbers = #tpu.dot_dimension_numbers<[1], [0], [0], [1], [0, 0, 1, 1], [], []>} : vector<4x8xf32>, vector<8x256xf32>, vector<4x256xf32> -> vector<4x256xf32>
    %c0_9 = arith.constant 0 : index
    %c0_10 = arith.constant 0 : index
    %12 = vector.load %arg7[%c0_9, %c0_10] : memref<4x1xf32, #tpu.memory_space<vmem>>, vector<4x1xf32>
    %13 = vector.broadcast %12 : vector<4x1xf32> to vector<4x256xf32>
    %14 = arith.addf %11, %13 : vector<4x256xf32>
    %cst_11 = arith.constant 0.000000e+00 : f32
    %15 = vector.broadcast %cst_11 : f32 to vector<4x256xf32>
    %16 = arith.maximumf %14, %15 : vector<4x256xf32>
    %c0_12 = arith.constant 0 : index
    %c0_13 = arith.constant 0 : index
    %17 = vector.load %arg2[%c0_12, %c0_13] : memref<1x256xf32, #tpu.memory_space<vmem>>, vector<1x256xf32>
    %c0_14 = arith.constant 0 : index
    %c0_15 = arith.constant 0 : index
    %18 = vector.load %arg3[%c0_14, %c0_15] : memref<1x256xf32, #tpu.memory_space<vmem>>, vector<1x256xf32>
    %cst_16 = arith.constant 1.000000e+00 : f32
    %19 = vector.broadcast %cst_16 : f32 to vector<1x256xf32>
    %20 = arith.cmpf oge, %17, %19 : vector<1x256xf32>
    %cst_17 = arith.constant 1.600000e+01 : f32
    %21 = vector.broadcast %cst_17 : f32 to vector<1x256xf32>
    %22 = arith.cmpf ole, %17, %21 : vector<1x256xf32>
    %23 = arith.andi %20, %22 : vector<1x256xi1>
    %cst_18 = arith.constant 1.000000e+00 : f32
    %24 = vector.broadcast %cst_18 : f32 to vector<1x256xf32>
    %25 = arith.cmpf oge, %18, %24 : vector<1x256xf32>
    %26 = arith.andi %23, %25 : vector<1x256xi1>
    %cst_19 = arith.constant 1.600000e+01 : f32
    %27 = vector.broadcast %cst_19 : f32 to vector<1x256xf32>
    %28 = arith.cmpf ole, %18, %27 : vector<1x256xf32>
    %29 = arith.andi %26, %28 : vector<1x256xi1>
    %c17_i32 = arith.constant 17 : i32
    %30 = tpu.dynamic_rotate %16 by %c17_i32 dim 1 : vector<4x256xf32>, i32 -> vector<4x256xf32>
    %31 = arith.extui %29 : vector<1x256xi1> to vector<1x256xi32>
    %32 = arith.sitofp %31 : vector<1x256xi32> to vector<1x256xf32>
    %33 = vector.broadcast %32 : vector<1x256xf32> to vector<4x256xf32>
    %34 = arith.mulf %30, %33 : vector<4x256xf32>
    %c0_20 = arith.constant 0 : index
    %c0_21 = arith.constant 0 : index
    %35 = vector.load %arg13[%c0_20, %c0_21] : memref<36x256xf32, #tpu.memory_space<vmem>>, vector<4x256xf32>
    tpu.vector_store %arg13[%c0_20, %c0_21], %34 {strides = array<i32>} : memref<36x256xf32, #tpu.memory_space<vmem>>, vector<4x256xf32>,
    %cst_22 = arith.constant 1.000000e+00 : f32
    %36 = vector.broadcast %cst_22 : f32 to vector<1x256xf32>
    %37 = arith.cmpf oge, %17, %36 : vector<1x256xf32>
    %cst_23 = arith.constant 1.600000e+01 : f32
    %38 = vector.broadcast %cst_23 : f32 to vector<1x256xf32>
    %39 = arith.cmpf ole, %17, %38 : vector<1x256xf32>
    %40 = arith.andi %37, %39 : vector<1x256xi1>
    %cst_24 = arith.constant 0.000000e+00 : f32
    %41 = vector.broadcast %cst_24 : f32 to vector<1x256xf32>
    %42 = arith.cmpf oge, %18, %41 : vector<1x256xf32>
    %43 = arith.andi %40, %42 : vector<1x256xi1>
    %cst_25 = arith.constant 1.500000e+01 : f32
    %44 = vector.broadcast %cst_25 : f32 to vector<1x256xf32>
    %45 = arith.cmpf ole, %18, %44 : vector<1x256xf32>
    %46 = arith.andi %43, %45 : vector<1x256xi1>
    %c16_i32 = arith.constant 16 : i32
    %47 = tpu.dynamic_rotate %16 by %c16_i32 dim 1 : vector<4x256xf32>, i32 -> vector<4x256xf32>
    %48 = arith.extui %46 : vector<1x256xi1> to vector<1x256xi32>
    %49 = arith.sitofp %48 : vector<1x256xi32> to vector<1x256xf32>
    %50 = vector.broadcast %49 : vector<1x256xf32> to vector<4x256xf32>
    %51 = arith.mulf %47, %50 : vector<4x256xf32>
    %c4 = arith.constant 4 : index
    %c0_26 = arith.constant 0 : index
    %52 = vector.load %arg13[%c4, %c0_26] : memref<36x256xf32, #tpu.memory_space<vmem>>, vector<4x256xf32>
    tpu.vector_store %arg13[%c4, %c0_26], %51 {strides = array<i32>} : memref<36x256xf32, #tpu.memory_space<vmem>>, vector<4x256xf32>,
    %cst_27 = arith.constant 1.000000e+00 : f32
    %53 = vector.broadcast %cst_27 : f32 to vector<1x256xf32>
    %54 = arith.cmpf oge, %17, %53 : vector<1x256xf32>
    %cst_28 = arith.constant 1.600000e+01 : f32
    %55 = vector.broadcast %cst_28 : f32 to vector<1x256xf32>
    %56 = arith.cmpf ole, %17, %55 : vector<1x256xf32>
    %57 = arith.andi %54, %56 : vector<1x256xi1>
    %cst_29 = arith.constant -1.000000e+00 : f32
    %58 = vector.broadcast %cst_29 : f32 to vector<1x256xf32>
    %59 = arith.cmpf oge, %18, %58 : vector<1x256xf32>
    %60 = arith.andi %57, %59 : vector<1x256xi1>
    %cst_30 = arith.constant 1.400000e+01 : f32
    %61 = vector.broadcast %cst_30 : f32 to vector<1x256xf32>
    %62 = arith.cmpf ole, %18, %61 : vector<1x256xf32>
    %63 = arith.andi %60, %62 : vector<1x256xi1>
    %c15_i32 = arith.constant 15 : i32
    %64 = tpu.dynamic_rotate %16 by %c15_i32 dim 1 : vector<4x256xf32>, i32 -> vector<4x256xf32>
    %65 = arith.extui %63 : vector<1x256xi1> to vector<1x256xi32>
    %66 = arith.sitofp %65 : vector<1x256xi32> to vector<1x256xf32>
    %67 = vector.broadcast %66 : vector<1x256xf32> to vector<4x256xf32>
    %68 = arith.mulf %64, %67 : vector<4x256xf32>
    %c8 = arith.constant 8 : index
    %c0_31 = arith.constant 0 : index
    %69 = vector.load %arg13[%c8, %c0_31] : memref<36x256xf32, #tpu.memory_space<vmem>>, vector<4x256xf32>
    tpu.vector_store %arg13[%c8, %c0_31], %68 {strides = array<i32>} : memref<36x256xf32, #tpu.memory_space<vmem>>, vector<4x256xf32>,
    %cst_32 = arith.constant 0.000000e+00 : f32
    %70 = vector.broadcast %cst_32 : f32 to vector<1x256xf32>
    %71 = arith.cmpf oge, %17, %70 : vector<1x256xf32>
    %cst_33 = arith.constant 1.500000e+01 : f32
    %72 = vector.broadcast %cst_33 : f32 to vector<1x256xf32>
    %73 = arith.cmpf ole, %17, %72 : vector<1x256xf32>
    %74 = arith.andi %71, %73 : vector<1x256xi1>
    %cst_34 = arith.constant 1.000000e+00 : f32
    %75 = vector.broadcast %cst_34 : f32 to vector<1x256xf32>
    %76 = arith.cmpf oge, %18, %75 : vector<1x256xf32>
    %77 = arith.andi %74, %76 : vector<1x256xi1>
    %cst_35 = arith.constant 1.600000e+01 : f32
    %78 = vector.broadcast %cst_35 : f32 to vector<1x256xf32>
    %79 = arith.cmpf ole, %18, %78 : vector<1x256xf32>
    %80 = arith.andi %77, %79 : vector<1x256xi1>
    %c1_i32 = arith.constant 1 : i32
    %81 = tpu.dynamic_rotate %16 by %c1_i32 dim 1 : vector<4x256xf32>, i32 -> vector<4x256xf32>
    %82 = arith.extui %80 : vector<1x256xi1> to vector<1x256xi32>
    %83 = arith.sitofp %82 : vector<1x256xi32> to vector<1x256xf32>
    %84 = vector.broadcast %83 : vector<1x256xf32> to vector<4x256xf32>
    %85 = arith.mulf %81, %84 : vector<4x256xf32>
    %c12 = arith.constant 12 : index
    %c0_36 = arith.constant 0 : index
    %86 = vector.load %arg13[%c12, %c0_36] : memref<36x256xf32, #tpu.memory_space<vmem>>, vector<4x256xf32>
    tpu.vector_store %arg13[%c12, %c0_36], %85 {strides = array<i32>} : memref<36x256xf32, #tpu.memory_space<vmem>>, vector<4x256xf32>,
    %c16 = arith.constant 16 : index
    %c0_37 = arith.constant 0 : index
    %87 = vector.load %arg13[%c16, %c0_37] : memref<36x256xf32, #tpu.memory_space<vmem>>, vector<4x256xf32>
    tpu.vector_store %arg13[%c16, %c0_37], %16 {strides = array<i32>} : memref<36x256xf32, #tpu.memory_space<vmem>>, vector<4x256xf32>,
    %cst_38 = arith.constant 0.000000e+00 : f32
    %88 = vector.broadcast %cst_38 : f32 to vector<1x256xf32>
    %89 = arith.cmpf oge, %17, %88 : vector<1x256xf32>
    %cst_39 = arith.constant 1.500000e+01 : f32
    %90 = vector.broadcast %cst_39 : f32 to vector<1x256xf32>
    %91 = arith.cmpf ole, %17, %90 : vector<1x256xf32>
    %92 = arith.andi %89, %91 : vector<1x256xi1>
    %cst_40 = arith.constant -1.000000e+00 : f32
    %93 = vector.broadcast %cst_40 : f32 to vector<1x256xf32>
    %94 = arith.cmpf oge, %18, %93 : vector<1x256xf32>
    %95 = arith.andi %92, %94 : vector<1x256xi1>
    %cst_41 = arith.constant 1.400000e+01 : f32
    %96 = vector.broadcast %cst_41 : f32 to vector<1x256xf32>
    %97 = arith.cmpf ole, %18, %96 : vector<1x256xf32>
    %98 = arith.andi %95, %97 : vector<1x256xi1>
    %c255_i32 = arith.constant 255 : i32
    %99 = tpu.dynamic_rotate %16 by %c255_i32 dim 1 : vector<4x256xf32>, i32 -> vector<4x256xf32>
    %100 = arith.extui %98 : vector<1x256xi1> to vector<1x256xi32>
    %101 = arith.sitofp %100 : vector<1x256xi32> to vector<1x256xf32>
    %102 = vector.broadcast %101 : vector<1x256xf32> to vector<4x256xf32>
    %103 = arith.mulf %99, %102 : vector<4x256xf32>
    %c20 = arith.constant 20 : index
    %c0_42 = arith.constant 0 : index
    %104 = vector.load %arg13[%c20, %c0_42] : memref<36x256xf32, #tpu.memory_space<vmem>>, vector<4x256xf32>
    tpu.vector_store %arg13[%c20, %c0_42], %103 {strides = array<i32>} : memref<36x256xf32, #tpu.memory_space<vmem>>, vector<4x256xf32>,
    %cst_43 = arith.constant -1.000000e+00 : f32
    %105 = vector.broadcast %cst_43 : f32 to vector<1x256xf32>
    %106 = arith.cmpf oge, %17, %105 : vector<1x256xf32>
    %cst_44 = arith.constant 1.400000e+01 : f32
    %107 = vector.broadcast %cst_44 : f32 to vector<1x256xf32>
    %108 = arith.cmpf ole, %17, %107 : vector<1x256xf32>
    %109 = arith.andi %106, %108 : vector<1x256xi1>
    %cst_45 = arith.constant 1.000000e+00 : f32
    %110 = vector.broadcast %cst_45 : f32 to vector<1x256xf32>
    %111 = arith.cmpf oge, %18, %110 : vector<1x256xf32>
    %112 = arith.andi %109, %111 : vector<1x256xi1>
    %cst_46 = arith.constant 1.600000e+01 : f32
    %113 = vector.broadcast %cst_46 : f32 to vector<1x256xf32>
    %114 = arith.cmpf ole, %18, %113 : vector<1x256xf32>
    %115 = arith.andi %112, %114 : vector<1x256xi1>
    %c241_i32 = arith.constant 241 : i32
    %116 = tpu.dynamic_rotate %16 by %c241_i32 dim 1 : vector<4x256xf32>, i32 -> vector<4x256xf32>
    %117 = arith.extui %115 : vector<1x256xi1> to vector<1x256xi32>
    %118 = arith.sitofp %117 : vector<1x256xi32> to vector<1x256xf32>
    %119 = vector.broadcast %118 : vector<1x256xf32> to vector<4x256xf32>
    %120 = arith.mulf %116, %119 : vector<4x256xf32>
    %c24 = arith.constant 24 : index
    %c0_47 = arith.constant 0 : index
    %121 = vector.load %arg13[%c24, %c0_47] : memref<36x256xf32, #tpu.memory_space<vmem>>, vector<4x256xf32>
    tpu.vector_store %arg13[%c24, %c0_47], %120 {strides = array<i32>} : memref<36x256xf32, #tpu.memory_space<vmem>>, vector<4x256xf32>,
    %cst_48 = arith.constant -1.000000e+00 : f32
    %122 = vector.broadcast %cst_48 : f32 to vector<1x256xf32>
    %123 = arith.cmpf oge, %17, %122 : vector<1x256xf32>
    %cst_49 = arith.constant 1.400000e+01 : f32
    %124 = vector.broadcast %cst_49 : f32 to vector<1x256xf32>
    %125 = arith.cmpf ole, %17, %124 : vector<1x256xf32>
    %126 = arith.andi %123, %125 : vector<1x256xi1>
    %cst_50 = arith.constant 0.000000e+00 : f32
    %127 = vector.broadcast %cst_50 : f32 to vector<1x256xf32>
    %128 = arith.cmpf oge, %18, %127 : vector<1x256xf32>
    %129 = arith.andi %126, %128 : vector<1x256xi1>
    %cst_51 = arith.constant 1.500000e+01 : f32
    %130 = vector.broadcast %cst_51 : f32 to vector<1x256xf32>
    %131 = arith.cmpf ole, %18, %130 : vector<1x256xf32>
    %132 = arith.andi %129, %131 : vector<1x256xi1>
    %c240_i32 = arith.constant 240 : i32
    %133 = tpu.dynamic_rotate %16 by %c240_i32 dim 1 : vector<4x256xf32>, i32 -> vector<4x256xf32>
    %134 = arith.extui %132 : vector<1x256xi1> to vector<1x256xi32>
    %135 = arith.sitofp %134 : vector<1x256xi32> to vector<1x256xf32>
    %136 = vector.broadcast %135 : vector<1x256xf32> to vector<4x256xf32>
    %137 = arith.mulf %133, %136 : vector<4x256xf32>
    %c28 = arith.constant 28 : index
    %c0_52 = arith.constant 0 : index
    %138 = vector.load %arg13[%c28, %c0_52] : memref<36x256xf32, #tpu.memory_space<vmem>>, vector<4x256xf32>
    tpu.vector_store %arg13[%c28, %c0_52], %137 {strides = array<i32>} : memref<36x256xf32, #tpu.memory_space<vmem>>, vector<4x256xf32>,
    %cst_53 = arith.constant -1.000000e+00 : f32
    %139 = vector.broadcast %cst_53 : f32 to vector<1x256xf32>
    %140 = arith.cmpf oge, %17, %139 : vector<1x256xf32>
    %cst_54 = arith.constant 1.400000e+01 : f32
    %141 = vector.broadcast %cst_54 : f32 to vector<1x256xf32>
    %142 = arith.cmpf ole, %17, %141 : vector<1x256xf32>
    %143 = arith.andi %140, %142 : vector<1x256xi1>
    %cst_55 = arith.constant -1.000000e+00 : f32
    %144 = vector.broadcast %cst_55 : f32 to vector<1x256xf32>
    %145 = arith.cmpf oge, %18, %144 : vector<1x256xf32>
    %146 = arith.andi %143, %145 : vector<1x256xi1>
    %cst_56 = arith.constant 1.400000e+01 : f32
    %147 = vector.broadcast %cst_56 : f32 to vector<1x256xf32>
    %148 = arith.cmpf ole, %18, %147 : vector<1x256xf32>
    %149 = arith.andi %146, %148 : vector<1x256xi1>
    %c239_i32 = arith.constant 239 : i32
    %150 = tpu.dynamic_rotate %16 by %c239_i32 dim 1 : vector<4x256xf32>, i32 -> vector<4x256xf32>
    %151 = arith.extui %149 : vector<1x256xi1> to vector<1x256xi32>
    %152 = arith.sitofp %151 : vector<1x256xi32> to vector<1x256xf32>
    %153 = vector.broadcast %152 : vector<1x256xf32> to vector<4x256xf32>
    %154 = arith.mulf %150, %153 : vector<4x256xf32>
    %c32 = arith.constant 32 : index
    %c0_57 = arith.constant 0 : index
    %155 = vector.load %arg13[%c32, %c0_57] : memref<36x256xf32, #tpu.memory_space<vmem>>, vector<4x256xf32>
    tpu.vector_store %arg13[%c32, %c0_57], %154 {strides = array<i32>} : memref<36x256xf32, #tpu.memory_space<vmem>>, vector<4x256xf32>,
    %c0_58 = arith.constant 0 : index
    %c0_59 = arith.constant 0 : index
    %156 = vector.load %arg8[%c0_58, %c0_59] : memref<4x36xf32, #tpu.memory_space<vmem>>, vector<4x36xf32>
    %c0_60 = arith.constant 0 : index
    %c0_61 = arith.constant 0 : index
    %157 = vector.load %arg13[%c0_60, %c0_61] : memref<36x256xf32, #tpu.memory_space<vmem>>, vector<36x256xf32>
    %cst_62 = arith.constant dense<0.000000e+00> : vector<4x256xf32>
    %158 = tpu.matmul %156, %157, %cst_62 {dimension_numbers = #tpu.dot_dimension_numbers<[1], [0], [0], [1], [0, 0, 1, 1], [], []>} : vector<4x36xf32>, vector<36x256xf32>, vector<4x256xf32> -> vector<4x256xf32>
    %c0_63 = arith.constant 0 : index
    %c0_64 = arith.constant 0 : index
    %159 = vector.load %arg9[%c0_63, %c0_64] : memref<4x1xf32, #tpu.memory_space<vmem>>, vector<4x1xf32>
    %160 = vector.broadcast %159 : vector<4x1xf32> to vector<4x256xf32>
    %161 = arith.addf %158, %160 : vector<4x256xf32>
    %cst_65 = arith.constant 0.000000e+00 : f32
    %162 = vector.broadcast %cst_65 : f32 to vector<4x256xf32>
    %163 = arith.maximumf %161, %162 : vector<4x256xf32>
    %c0_66 = arith.constant 0 : index
    %c0_67 = arith.constant 0 : index
    %164 = vector.load %arg10[%c0_66, %c0_67] : memref<8x4xf32, #tpu.memory_space<vmem>>, vector<8x4xf32>
    %cst_68 = arith.constant dense<0.000000e+00> : vector<8x256xf32>
    %165 = tpu.matmul %164, %163, %cst_68 {dimension_numbers = #tpu.dot_dimension_numbers<[1], [0], [0], [1], [0, 0, 1, 1], [], []>} : vector<8x4xf32>, vector<4x256xf32>, vector<8x256xf32> -> vector<8x256xf32>
    %c0_69 = arith.constant 0 : index
    %c0_70 = arith.constant 0 : index
    %166 = vector.load %arg11[%c0_69, %c0_70] : memref<8x1xf32, #tpu.memory_space<vmem>>, vector<8x1xf32>
    %167 = vector.broadcast %166 : vector<8x1xf32> to vector<8x256xf32>
    %168 = arith.addf %165, %167 : vector<8x256xf32>
    %c0_71 = arith.constant 0 : index
    %c0_72 = arith.constant 0 : index
    %c0_73 = arith.constant 0 : index
    %169 = vector.load %arg1[%c0_71, %c0_72, %c0_73] : memref<1x8x256xf32, #tpu.memory_space<vmem>>, vector<1x8x256xf32>
    %170 = vector.shape_cast %169 : vector<1x8x256xf32> to vector<8x256xf32>
    %171 = arith.addf %168, %170 : vector<8x256xf32>
    %c0_74 = arith.constant 0 : index
    %c0_75 = arith.constant 0 : index
    %c0_76 = arith.constant 0 : index
    %172 = vector.load %arg12[%c0_74, %c0_75, %c0_76] : memref<1x8x256xf32, #tpu.memory_space<vmem>>, vector<1x8x256xf32>
    %173 = vector.shape_cast %172 : vector<1x8x256xf32> to vector<8x256xf32>
    %174 = vector.shape_cast %171 : vector<8x256xf32> to vector<1x8x256xf32>
    tpu.vector_store %arg12[%c0_74, %c0_75, %c0_76], %174 {strides = array<i32>} : memref<1x8x256xf32, #tpu.memory_space<vmem>>, vector<1x8x256xf32>,
    return
  }
  func.func @transform_0(%arg0: i32) -> (i32, i32, i32) {
    %c0_i32 = arith.constant 0 : i32
    %c0_i32_0 = arith.constant 0 : i32
    %c0_i32_1 = arith.constant 0 : i32
    return %arg0, %c0_i32, %c0_i32_0 : i32, i32, i32
  }
  func.func @transform_1(%arg0: i32) -> (i32, i32) {
    %c0_i32 = arith.constant 0 : i32
    %c0_i32_0 = arith.constant 0 : i32
    %c0_i32_1 = arith.constant 0 : i32
    return %c0_i32, %c0_i32_0 : i32, i32
  }
  func.func @transform_2(%arg0: i32) -> (i32, i32) {
    %c0_i32 = arith.constant 0 : i32
    %c0_i32_0 = arith.constant 0 : i32
    %c0_i32_1 = arith.constant 0 : i32
    return %c0_i32, %c0_i32_0 : i32, i32
  }
  func.func @transform_3(%arg0: i32) -> (i32, i32) {
    %c0_i32 = arith.constant 0 : i32
    %c0_i32_0 = arith.constant 0 : i32
    %c0_i32_1 = arith.constant 0 : i32
    return %c0_i32, %c0_i32_0 : i32, i32
  }
  func.func @transform_4(%arg0: i32) -> (i32, i32) {
    %c0_i32 = arith.constant 0 : i32
    %c0_i32_0 = arith.constant 0 : i32
    %c0_i32_1 = arith.constant 0 : i32
    return %c0_i32, %c0_i32_0 : i32, i32
  }
  func.func @transform_5(%arg0: i32) -> (i32, i32) {
    %c0_i32 = arith.constant 0 : i32
    %c0_i32_0 = arith.constant 0 : i32
    %c0_i32_1 = arith.constant 0 : i32
    return %c0_i32, %c0_i32_0 : i32, i32
  }
  func.func @transform_6(%arg0: i32) -> (i32, i32) {
    %c0_i32 = arith.constant 0 : i32
    %c0_i32_0 = arith.constant 0 : i32
    %c0_i32_1 = arith.constant 0 : i32
    return %c0_i32, %c0_i32_0 : i32, i32
  }
  func.func @transform_7(%arg0: i32) -> (i32, i32) {
    %c0_i32 = arith.constant 0 : i32
    %c0_i32_0 = arith.constant 0 : i32
    %c0_i32_1 = arith.constant 0 : i32
    return %c0_i32, %c0_i32_0 : i32, i32
  }
  func.func @transform_8(%arg0: i32) -> (i32, i32) {
    %c0_i32 = arith.constant 0 : i32
    %c0_i32_0 = arith.constant 0 : i32
    %c0_i32_1 = arith.constant 0 : i32
    return %c0_i32, %c0_i32_0 : i32, i32
  }
  func.func @transform_9(%arg0: i32) -> (i32, i32) {
    %c0_i32 = arith.constant 0 : i32
    %c0_i32_0 = arith.constant 0 : i32
    %c0_i32_1 = arith.constant 0 : i32
    return %c0_i32, %c0_i32_0 : i32, i32
  }
  func.func @transform_10(%arg0: i32) -> (i32, i32) {
    %c0_i32 = arith.constant 0 : i32
    %c0_i32_0 = arith.constant 0 : i32
    %c0_i32_1 = arith.constant 0 : i32
    return %c0_i32, %c0_i32_0 : i32, i32
  }
  func.func @transform_11(%arg0: i32) -> (i32, i32, i32) {
    %c0_i32 = arith.constant 0 : i32
    %c0_i32_0 = arith.constant 0 : i32
    %c0_i32_1 = arith.constant 0 : i32
    return %arg0, %c0_i32, %c0_i32_0 : i32, i32, i32
  }
}

</mosaic_0001>

<llo_original>
// kernel: bottleneck_forward.1
$region0: #{bottleneck_forward.1}
  #allocation0 [shape = 'u32[]', space=smem, size = 0x4, offset = 0x4, fixed_abs, tag = 'smem constant byte address 0x4 - core index']
  #allocation1 [shape = 'u32[144,128]{1,0:T(1,128)}', space=vmem, size = 0x12000, scoped, tag = 'internal scratch']
  #allocation2 [shape = 'f32[36,256]{1,0:T(8,128)}', space=vmem, size = 0xa000, scoped, tag = 'scratch operand']
  %s0 = inlined_call_operand.vmem [shape: f32[2,8,256], index: 0, kind: input, shape index: {}]
  %s1 = inlined_call_operand.vmem [shape: f32[1,256], index: 1, kind: input, shape index: {}]
  %s2 = inlined_call_operand.vmem [shape: f32[1,256], index: 2, kind: input, shape index: {}]
  %s3 = inlined_call_operand.vmem [shape: f32[8,1], index: 3, kind: input, shape index: {}]
  %s4 = inlined_call_operand.vmem [shape: f32[8,1], index: 4, kind: input, shape index: {}]
  %s5 = inlined_call_operand.vmem [shape: f32[4,8], index: 5, kind: input, shape index: {}]
  %s6 = inlined_call_operand.vmem [shape: f32[4,1], index: 6, kind: input, shape index: {}]
  %s7 = inlined_call_operand.vmem [shape: f32[4,36], index: 7, kind: input, shape index: {}]
  %s8 = inlined_call_operand.vmem [shape: f32[4,1], index: 8, kind: input, shape index: {}]
  %s9 = inlined_call_operand.vmem [shape: f32[8,4], index: 9, kind: input, shape index: {}]
  %s10 = inlined_call_operand.vmem [shape: f32[8,1], index: 10, kind: input, shape index: {}]
  %s11 = inlined_call_operand.vmem [shape: f32[2,8,256], index: 11, kind: output, shape index: {}]
  %s12 = sld [smem:[#allocation0]]
  $region77: #{bottleneck_forward.1} parent=0
    _
  %s14 = ssub.s32 1, %s12
  %s15 = scalar_select 0, %s14, %s12
  loop: start=0, step=1, limit=4
  $region2: #{bottleneck_forward.1} parent=0 // loop_pre_header
    _
  $region3: #{bottleneck_forward.1} parent=0 // loop_header
    %s17 = sphi 0, %s21
    %p18 = scmp.ge.s32.totalorder %s17, 4
    %s27 = sphi 0, %s29
    %s30 = sphi 0, %s27
    %s31 = sphi 0, %s30
    %s47 = sphi 0, %s31
    %s51 = sphi 0, %s51
    %s53 = sphi 0, %s51
    %s54 = sphi 0, %s53
    %s68 = sphi 0, %s54
    %s72 = sphi 0, %s72
    %s74 = sphi 0, %s72
    %s75 = sphi 0, %s74
    %s89 = sphi 0, %s75
    %s93 = sphi 0, %s93
    %s95 = sphi 0, %s93
    %s96 = sphi 0, %s95
    %s110 = sphi 0, %s96
    %s114 = sphi 0, %s114
    %s116 = sphi 0, %s114
    %s117 = sphi 0, %s116
    %s131 = sphi 0, %s117
    %s135 = sphi 0, %s135
    %s137 = sphi 0, %s135
    %s138 = sphi 0, %s137
    %s152 = sphi 0, %s138
    %s156 = sphi 0, %s156
    %s158 = sphi 0, %s156
    %s159 = sphi 0, %s158
    %s173 = sphi 0, %s159
    %s177 = sphi 0, %s177
    %s179 = sphi 0, %s177
    %s180 = sphi 0, %s179
    %s194 = sphi 0, %s180
    %s198 = sphi 0, %s198
    %s200 = sphi 0, %s198
    %s201 = sphi 0, %s200
    %s215 = sphi 0, %s201
    %s219 = sphi 0, %s219
    %s221 = sphi 0, %s219
    %s222 = sphi 0, %s221
    %s236 = sphi 0, %s222
    %s240 = sphi 0, %s240
    %s242 = sphi 0, %s240
    %s243 = sphi 0, %s242
    %s257 = sphi 0, %s243
    %s263 = sphi 0, %s265
    %s266 = sphi 0, %s263
    %s267 = sphi 0, %s266
    %s283 = sphi 0, %s267
  $region4: #{bottleneck_forward.1} parent=0 // loop_header_branch
    %20 = sbr.rel (%p18) target = $region8
  $region5: #{bottleneck_forward.1} parent=0 // loop_body
    %s22 = ssub.s32 %s17, 1
    %s23 = ssub.s32 %s17, 2
    %s24 = sadd.s32 %s17, 1
    %s25 = ssub.s32 %s17, %s24
    %p26 = scmp.eq.s32.totalorder %s25, 0
    %s28 = sadd.s32 %s27, 1
    %s29 = scalar_select %p26, %s27, %s28
    %p32 = pneg %p26
    %p33 = scmp.eq.s32.totalorder %s17, 1
    %p34 = por %p32, %p33
    %p35 = scmp.ne.s32.totalorder %s27, %s30
    %p36 = scmp.eq.s32.totalorder %s17, 0
    %p37 = por %p35, %p36
    %p38 = scmp.ne.s32.totalorder %s27, %s30
    %p39 = scmp.eq.s32.totalorder %s22, 1
    %p40 = por %p38, %p39
    %p41 = scmp.ne.s32.totalorder %s30, %s31
    %p42 = scmp.eq.s32.totalorder %s22, 0
    %p43 = por %p41, %p42
    %p44 = scmp.ne.s32.totalorder %s30, %s31
    %p45 = scmp.eq.s32.totalorder %s23, 1
    %p46 = por %p44, %p45
    %p48 = scmp.ne.s32.totalorder %s31, %s47
    %p49 = scmp.eq.s32.totalorder %s23, 0
    %p50 = por %p48, %p49
    %s52 = sadd.s32 %s51, 1
    %p55 = scmp.eq.s32.totalorder %s17, 1
    %p56 = scmp.ne.s32.totalorder %s51, %s53
    %p57 = scmp.eq.s32.totalorder %s17, 0
    %p58 = por %p56, %p57
    %p59 = scmp.ne.s32.totalorder %s51, %s53
    %p60 = scmp.eq.s32.totalorder %s22, 1
    %p61 = por %p59, %p60
    %p62 = scmp.ne.s32.totalorder %s53, %s54
    %p63 = scmp.eq.s32.totalorder %s22, 0
    %p64 = por %p62, %p63
    %p65 = scmp.ne.s32.totalorder %s53, %s54
    %p66 = scmp.eq.s32.totalorder %s23, 1
    %p67 = por %p65, %p66
    %p69 = scmp.ne.s32.totalorder %s54, %s68
    %p70 = scmp.eq.s32.totalorder %s23, 0
    %p71 = por %p69, %p70
    %s73 = sadd.s32 %s72, 1
    %p76 = scmp.eq.s32.totalorder %s17, 1
    %p77 = scmp.ne.s32.totalorder %s72, %s74
    %p78 = scmp.eq.s32.totalorder %s17, 0
    %p79 = por %p77, %p78
    %p80 = scmp.ne.s32.totalorder %s72, %s74
    %p81 = scmp.eq.s32.totalorder %s22, 1
    %p82 = por %p80, %p81
    %p83 = scmp.ne.s32.totalorder %s74, %s75
    %p84 = scmp.eq.s32.totalorder %s22, 0
    %p85 = por %p83, %p84
    %p86 = scmp.ne.s32.totalorder %s74, %s75
    %p87 = scmp.eq.s32.totalorder %s23, 1
    %p88 = por %p86, %p87
    %p90 = scmp.ne.s32.totalorder %s75, %s89
    %p91 = scmp.eq.s32.totalorder %s23, 0
    %p92 = por %p90, %p91
    %s94 = sadd.s32 %s93, 1
    %p97 = scmp.eq.s32.totalorder %s17, 1
    %p98 = scmp.ne.s32.totalorder %s93, %s95
    %p99 = scmp.eq.s32.totalorder %s17, 0
    %p100 = por %p98, %p99
    %p101 = scmp.ne.s32.totalorder %s93, %s95
    %p102 = scmp.eq.s32.totalorder %s22, 1
    %p103 = por %p101, %p102
    %p104 = scmp.ne.s32.totalorder %s95, %s96
    %p105 = scmp.eq.s32.totalorder %s22, 0
    %p106 = por %p104, %p105
    %p107 = scmp.ne.s32.totalorder %s95, %s96
    %p108 = scmp.eq.s32.totalorder %s23, 1
    %p109 = por %p107, %p108
    %p111 = scmp.ne.s32.totalorder %s96, %s110
    %p112 = scmp.eq.s32.totalorder %s23, 0
    %p113 = por %p111, %p112
    %s115 = sadd.s32 %s114, 1
    %p118 = scmp.eq.s32.totalorder %s17, 1
    %p119 = scmp.ne.s32.totalorder %s114, %s116
    %p120 = scmp.eq.s32.totalorder %s17, 0
    %p121 = por %p119, %p120
    %p122 = scmp.ne.s32.totalorder %s114, %s116
    %p123 = scmp.eq.s32.totalorder %s22, 1
    %p124 = por %p122, %p123
    %p125 = scmp.ne.s32.totalorder %s116, %s117
    %p126 = scmp.eq.s32.totalorder %s22, 0
    %p127 = por %p125, %p126
    %p128 = scmp.ne.s32.totalorder %s116, %s117
    %p129 = scmp.eq.s32.totalorder %s23, 1
    %p130 = por %p128, %p129
    %p132 = scmp.ne.s32.totalorder %s117, %s131
    %p133 = scmp.eq.s32.totalorder %s23, 0
    %p134 = por %p132, %p133
    %s136 = sadd.s32 %s135, 1
    %p139 = scmp.eq.s32.totalorder %s17, 1
    %p140 = scmp.ne.s32.totalorder %s135, %s137
    %p141 = scmp.eq.s32.totalorder %s17, 0
    %p142 = por %p140, %p141
    %p143 = scmp.ne.s32.totalorder %s135, %s137
    %p144 = scmp.eq.s32.totalorder %s22, 1
    %p145 = por %p143, %p144
    %p146 = scmp.ne.s32.totalorder %s137, %s138
    %p147 = scmp.eq.s32.totalorder %s22, 0
    %p148 = por %p146, %p147
    %p149 = scmp.ne.s32.totalorder %s137, %s138
    %p150 = scmp.eq.s32.totalorder %s23, 1
    %p151 = por %p149, %p150
    %p153 = scmp.ne.s32.totalorder %s138, %s152
    %p154 = scmp.eq.s32.totalorder %s23, 0
    %p155 = por %p153, %p154
    %s157 = sadd.s32 %s156, 1
    %p160 = scmp.eq.s32.totalorder %s17, 1
    %p161 = scmp.ne.s32.totalorder %s156, %s158
    %p162 = scmp.eq.s32.totalorder %s17, 0
    %p163 = por %p161, %p162
    %p164 = scmp.ne.s32.totalorder %s156, %s158
    %p165 = scmp.eq.s32.totalorder %s22, 1
    %p166 = por %p164, %p165
    %p167 = scmp.ne.s32.totalorder %s158, %s159
    %p168 = scmp.eq.s32.totalorder %s22, 0
    %p169 = por %p167, %p168
    %p170 = scmp.ne.s32.totalorder %s158, %s159
    %p171 = scmp.eq.s32.totalorder %s23, 1
    %p172 = por %p170, %p171
    %p174 = scmp.ne.s32.totalorder %s159, %s173
    %p175 = scmp.eq.s32.totalorder %s23, 0
    %p176 = por %p174, %p175
    %s178 = sadd.s32 %s177, 1
    %p181 = scmp.eq.s32.totalorder %s17, 1
    %p182 = scmp.ne.s32.totalorder %s177, %s179
    %p183 = scmp.eq.s32.totalorder %s17, 0
    %p184 = por %p182, %p183
    %p185 = scmp.ne.s32.totalorder %s177, %s179
    %p186 = scmp.eq.s32.totalorder %s22, 1
    %p187 = por %p185, %p186
    %p188 = scmp.ne.s32.totalorder %s179, %s180
    %p189 = scmp.eq.s32.totalorder %s22, 0
    %p190 = por %p188, %p189
    %p191 = scmp.ne.s32.totalorder %s179, %s180
    %p192 = scmp.eq.s32.totalorder %s23, 1
    %p193 = por %p191, %p192
    %p195 = scmp.ne.s32.totalorder %s180, %s194
    %p196 = scmp.eq.s32.totalorder %s23, 0
    %p197 = por %p195, %p196
    %s199 = sadd.s32 %s198, 1
    %p202 = scmp.eq.s32.totalorder %s17, 1
    %p203 = scmp.ne.s32.totalorder %s198, %s200
    %p204 = scmp.eq.s32.totalorder %s17, 0
    %p205 = por %p203, %p204
    %p206 = scmp.ne.s32.totalorder %s198, %s200
    %p207 = scmp.eq.s32.totalorder %s22, 1
    %p208 = por %p206, %p207
    %p209 = scmp.ne.s32.totalorder %s200, %s201
    %p210 = scmp.eq.s32.totalorder %s22, 0
    %p211 = por %p209, %p210
    %p212 = scmp.ne.s32.totalorder %s200, %s201
    %p213 = scmp.eq.s32.totalorder %s23, 1
    %p214 = por %p212, %p213
    %p216 = scmp.ne.s32.totalorder %s201, %s215
    %p217 = scmp.eq.s32.totalorder %s23, 0
    %p218 = por %p216, %p217
    %s220 = sadd.s32 %s219, 1
    %p223 = scmp.eq.s32.totalorder %s17, 1
    %p224 = scmp.ne.s32.totalorder %s219, %s221
    %p225 = scmp.eq.s32.totalorder %s17, 0
    %p226 = por %p224, %p225
    %p227 = scmp.ne.s32.totalorder %s219, %s221
    %p228 = scmp.eq.s32.totalorder %s22, 1
    %p229 = por %p227, %p228
    %p230 = scmp.ne.s32.totalorder %s221, %s222
    %p231 = scmp.eq.s32.totalorder %s22, 0
    %p232 = por %p230, %p231
    %p233 = scmp.ne.s32.totalorder %s221, %s222
    %p234 = scmp.eq.s32.totalorder %s23, 1
    %p235 = por %p233, %p234
    %p237 = scmp.ne.s32.totalorder %s222, %s236
    %p238 = scmp.eq.s32.totalorder %s23, 0
    %p239 = por %p237, %p238
    %s241 = sadd.s32 %s240, 1
    %p244 = scmp.eq.s32.totalorder %s17, 1
    %p245 = scmp.ne.s32.totalorder %s240, %s242
    %p246 = scmp.eq.s32.totalorder %s17, 0
    %p247 = por %p245, %p246
    %p248 = scmp.ne.s32.totalorder %s240, %s242
    %p249 = scmp.eq.s32.totalorder %s22, 1
    %p250 = por %p248, %p249
    %p251 = scmp.ne.s32.totalorder %s242, %s243
    %p252 = scmp.eq.s32.totalorder %s22, 0
    %p253 = por %p251, %p252
    %p254 = scmp.ne.s32.totalorder %s242, %s243
    %p255 = scmp.eq.s32.totalorder %s23, 1
    %p256 = por %p254, %p255
    %p258 = scmp.ne.s32.totalorder %s243, %s257
    %p259 = scmp.eq.s32.totalorder %s23, 0
    %p260 = por %p258, %p259
    %s261 = ssub.s32 %s17, %s24
    %p262 = scmp.eq.s32.totalorder %s261, 0
    %s264 = sadd.s32 %s263, 1
    %s265 = scalar_select %p262, %s263, %s264
    %p268 = pneg %p262
    %p269 = scmp.eq.s32.totalorder %s17, 1
    %p270 = por %p268, %p269
    %p271 = scmp.ne.s32.totalorder %s263, %s266
    %p272 = scmp.eq.s32.totalorder %s17, 0
    %p273 = por %p271, %p272
    %p274 = scmp.ne.s32.totalorder %s263, %s266
    %p275 = scmp.eq.s32.totalorder %s22, 1
    %p276 = por %p274, %p275
    %p277 = scmp.ne.s32.totalorder %s266, %s267
    %p278 = scmp.eq.s32.totalorder %s22, 0
    %p279 = por %p277, %p278
    %p280 = scmp.ne.s32.totalorder %s266, %s267
    %p281 = scmp.eq.s32.totalorder %s23, 1
    %p282 = por %p280, %p281
    %p284 = scmp.ne.s32.totalorder %s267, %s283
    %p285 = scmp.eq.s32.totalorder %s23, 0
    %p286 = por %p284, %p285
    %p287 = scmp.le.s32.totalorder 1, %s17
    %p288 = scmp.lt.s32.totalorder %s17, 3
    %p289 = pnand %p287, %p288
    %p290 = pneg %p289
    // Predicated region
    $region9: #{bottleneck_forward.1} parent=5 // pred_check
      _
    $region10: #{bottleneck_forward.1} parent=5 // pred_check_branch
      %292 = sbr.rel (%p289) target = $region12
    $region11: #{bottleneck_forward.1} parent=5 // pred_region
      %s293 = ssub.s32 %s17, 1
      // Predicated region
      $region13: #{bottleneck_forward.1} parent=11 // pred_check
        %p294 = pneg %p64
      $region14: #{bottleneck_forward.1} parent=11 // pred_check_branch
        %296 = sbr.rel (%p294) target = $region16
      $region15: #{bottleneck_forward.1} parent=11 // pred_region
        _
      $region16: #{bottleneck_forward.1} parent=11 // pred_fallthru
        _
      // Predicated region
      $region17: #{bottleneck_forward.1} parent=11 // pred_check
        %p297 = pneg %p85
      $region18: #{bottleneck_forward.1} parent=11 // pred_check_branch
        %299 = sbr.rel (%p297) target = $region20
      $region19: #{bottleneck_forward.1} parent=11 // pred_region
        _
      $region20: #{bottleneck_forward.1} parent=11 // pred_fallthru
        _
      // Predicated region
      $region21: #{bottleneck_forward.1} parent=11 // pred_check
        %p300 = pneg %p106
      $region22: #{bottleneck_forward.1} parent=11 // pred_check_branch
        %302 = sbr.rel (%p300) target = $region24
      $region23: #{bottleneck_forward.1} parent=11 // pred_region
        _
      $region24: #{bottleneck_forward.1} parent=11 // pred_fallthru
        _
      // Predicated region
      $region25: #{bottleneck_forward.1} parent=11 // pred_check
        %p303 = pneg %p127
      $region26: #{bottleneck_forward.1} parent=11 // pred_check_branch
        %305 = sbr.rel (%p303) target = $region28
      $region27: #{bottleneck_forward.1} parent=11 // pred_region
        _
      $region28: #{bottleneck_forward.1} parent=11 // pred_fallthru
        _
      // Predicated region
      $region29: #{bottleneck_forward.1} parent=11 // pred_check
        %p306 = pneg %p148
      $region30: #{bottleneck_forward.1} parent=11 // pred_check_branch
        %308 = sbr.rel (%p306) target = $region32
      $region31: #{bottleneck_forward.1} parent=11 // pred_region
        _
      $region32: #{bottleneck_forward.1} parent=11 // pred_fallthru
        _
      // Predicated region
      $region33: #{bottleneck_forward.1} parent=11 // pred_check
        %p309 = pneg %p169
      $region34: #{bottleneck_forward.1} parent=11 // pred_check_branch
        %311 = sbr.rel (%p309) target = $region36
      $region35: #{bottleneck_forward.1} parent=11 // pred_region
        _
      $region36: #{bottleneck_forward.1} parent=11 // pred_fallthru
        _
      // Predicated region
      $region37: #{bottleneck_forward.1} parent=11 // pred_check
        %p312 = pneg %p190
      $region38: #{bottleneck_forward.1} parent=11 // pred_check_branch
        %314 = sbr.rel (%p312) target = $region40
      $region39: #{bottleneck_forward.1} parent=11 // pred_region
        _
      $region40: #{bottleneck_forward.1} parent=11 // pred_fallthru
        _
      // Predicated region
      $region41: #{bottleneck_forward.1} parent=11 // pred_check
        %p315 = pneg %p211
      $region42: #{bottleneck_forward.1} parent=11 // pred_check_branch
        %317 = sbr.rel (%p315) target = $region44
      $region43: #{bottleneck_forward.1} parent=11 // pred_region
        _
      $region44: #{bottleneck_forward.1} parent=11 // pred_fallthru
        _
      // Predicated region
      $region45: #{bottleneck_forward.1} parent=11 // pred_check
        %p318 = pneg %p232
      $region46: #{bottleneck_forward.1} parent=11 // pred_check_branch
        %320 = sbr.rel (%p318) target = $region48
      $region47: #{bottleneck_forward.1} parent=11 // pred_region
        _
      $region48: #{bottleneck_forward.1} parent=11 // pred_fallthru
        _
      // Predicated region
      $region49: #{bottleneck_forward.1} parent=11 // pred_check
        %p321 = pneg %p253
      $region50: #{bottleneck_forward.1} parent=11 // pred_check_branch
        %323 = sbr.rel (%p321) target = $region52
      $region51: #{bottleneck_forward.1} parent=11 // pred_region
        _
      $region52: #{bottleneck_forward.1} parent=11 // pred_fallthru
        _
    $region12: #{bottleneck_forward.1} parent=5 // pred_fallthru
      _
    %p324 = scmp.lt.s32.totalorder %s17, 2
    // Predicated region
    $region53: #{bottleneck_forward.1} parent=5 // pred_check
      %p325 = pneg %p324
    $region54: #{bottleneck_forward.1} parent=5 // pred_check_branch
      %327 = sbr.rel (%p325) target = $region56
    $region55: #{bottleneck_forward.1} parent=5 // pred_region
      // Predicated region
      $region57: #{bottleneck_forward.1} parent=55 // pred_check
        %p328 = pneg %p37
      $region58: #{bottleneck_forward.1} parent=55 // pred_check_branch
        %330 = sbr.rel (%p328) target = $region60
      $region59: #{bottleneck_forward.1} parent=55 // pred_region
        %p331 = scmp.lt.s32.totalorder %s17, 1
        %s332 = scalar_select %p331, %s17, 1
        %s333 = smul.addr %s332, 2
        %s334 = smul.addr %s333, 8
        %s335 = scalar_lea.vmem %s0, %s334
      $region60: #{bottleneck_forward.1} parent=55 // pred_fallthru
        _
    $region56: #{bottleneck_forward.1} parent=5 // pred_fallthru
      _
    %p336 = scmp.le.s32.totalorder 1, %s17
    %p337 = scmp.lt.s32.totalorder %s17, 3
    %p338 = pnand %p336, %p337
    %p339 = pneg %p338
    // Predicated region
    $region61: #{bottleneck_forward.1} parent=5 // pred_check
      _
    $region62: #{bottleneck_forward.1} parent=5 // pred_check_branch
      %341 = sbr.rel (%p338) target = $region64
    $region63: #{bottleneck_forward.1} parent=5 // pred_region
      %s342 = ssub.s32 %s17, 1
      %p343 = scmp.lt.s32.totalorder %s22, 1
      %s344 = scalar_select %p343, %s22, 1
      %s345 = smul.addr %s344, 2
      %s346 = smul.addr %s345, 8
      %s347 = scalar_lea.vmem %s0, %s346
      %p348 = pneg %p43
      %p349 = pneg %p40
      %p350 = pneg %p64
      %p351 = pneg %p61
      %p352 = pneg %p85
      %p353 = pneg %p82
      %p354 = pneg %p106
      %p355 = pneg %p103
      %p356 = pneg %p127
      %p357 = pneg %p124
      %p358 = pneg %p148
      %p359 = pneg %p145
      %p360 = pneg %p169
      %p361 = pneg %p166
      %p362 = pneg %p190
      %p363 = pneg %p187
      %p364 = pneg %p211
      %p365 = pneg %p208
      %p366 = pneg %p232
      %p367 = pneg %p229
      %p368 = pneg %p253
      %p369 = pneg %p250
      %p370 = pneg %p279
      %p371 = pneg %p276
      %p372 = scmp.lt.s32.totalorder %s22, 1
      %s373 = scalar_select %p372, %s22, 1
      %s374 = smul.addr %s373, 2
      %s375 = smul.addr %s374, 8
      %s376 = scalar_lea.vmem %s11, %s375
      %p377 = scmp.lt.s32.totalorder %s22, 1
      %s378 = scalar_select %p377, %s22, 1
      %s379 = smul.addr %s378, 2
      %s380 = smul.addr %s379, 8
      %s381 = scalar_lea.vmem %s0, %s380
      %p382 = scmp.lt.s32.totalorder %s22, 1
      %s383 = scalar_select %p382, %s22, 1
      %s384 = smul.addr %s383, 2
      %s385 = smul.addr %s384, 8
      %s386 = scalar_lea.vmem %s11, %s385
      %v387 = vld [vmem:[%s381] sm:$0xff]
      %v388 = vld [vmem:[%s381 + $0x8] sm:$0xff]
      %v389 = vld [vmem:[%s3] sm:$0xff]
      %391 = vset.pattern.permute.xlu0 0
      %392 = vperm.xlu0 %391, %v389
      %v393 = vpop.permute.xlu0 %392
      %v395 = vmul.f32 %v387, %v393
      %v396 = vmul.f32 %v388, %v393
      %v397 = vld [vmem:[%s4] sm:$0xff]
      %399 = vset.pattern.permute.xlu0 0
      %400 = vperm.xlu0 %399, %v397
      %v401 = vpop.permute.xlu0 %400
      %v403 = vadd.f32 %v395, %v401
      %v404 = vadd.f32 %v396, %v401
      %v405 = vmax.f32 %v403, 0.0
      %v406 = vmax.f32 %v404, 0.0
      %v407 = vld [vmem:[%s5] sm:$0xf]
      %v408 = vld [vmem:[%s6] sm:$0xf]
      %410 = vset.pattern.permute.xlu0 0
      %411 = vperm.xlu0 %410, %v408
      %v412 = vpop.permute.xlu0 %411
      %vm414 = vcmask 64512
      %v416 = vsel %vm414, %v407, 0
      %418 = vmatprep.subr.mxu0 %v406
      %419 = vmatpush1.msra.mxu0 %v405
      %420 = vmatprep.subr.mxu0 0.0
      %421 = vmatpush1.msra.mxu0 0.0
      %422 = vmatprep.subr.mxu0 0.0
      %423 = vmatpush1.msra.mxu0 0.0
      %424 = vmatprep.subr.mxu0 0.0
      %425 = vmatpush1.msra.mxu0 0.0
      %426 = vmatprep.subr.mxu0 0.0
      %427 = vmatpush1.msra.mxu0 0.0
      %428 = vmatprep.subr.mxu0 0.0
      %429 = vmatpush1.msra.mxu0 0.0
      %430 = vmatprep.subr.mxu0 0.0
      %431 = vmatpush1.msra.mxu0 0.0
      %432 = vmatprep.subr.mxu0 0.0
      %433 = vmatpush1.msra.mxu0 0.0
      %434 = vmatprep.subr.mxu0 0.0
      %435 = vmatpush1.msra.mxu0 0.0
      %436 = vmatprep.subr.mxu0 0.0
      %437 = vmatpush1.msra.mxu0 0.0
      %438 = vmatprep.subr.mxu0 0.0
      %439 = vmatpush1.msra.mxu0 0.0
      %440 = vmatprep.subr.mxu0 0.0
      %441 = vmatpush1.msra.mxu0 0.0
      %442 = vmatprep.subr.mxu0 0.0
      %443 = vmatpush1.msra.mxu0 0.0
      %444 = vmatprep.subr.mxu0 0.0
      %445 = vmatpush1.msra.mxu0 0.0
      %446 = vmatprep.subr.mxu0 0.0
      %447 = vmatpush1.msra.mxu0 0.0
      %448 = vmatprep.subr.mxu0 0.0
      %449 = vmatpush1.msra.mxu0 0.0
      %450 = vmatprep.subr.mxu0 0.0
      %451 = vmatpush1.msra.mxu0 0.0
      %452 = vmatprep.subr.mxu0 0.0
      %453 = vmatpush1.msra.mxu0 0.0
      %454 = vmatprep.subr.mxu0 0.0
      %455 = vmatpush1.msra.mxu0 0.0
      %456 = vmatprep.subr.mxu0 0.0
      %457 = vmatpush1.msra.mxu0 0.0
      %458 = vmatprep.subr.mxu0 0.0
      %459 = vmatpush1.msra.mxu0 0.0
      %460 = vmatprep.subr.mxu0 0.0
      %461 = vmatpush1.msra.mxu0 0.0
      %462 = vmatprep.subr.mxu0 0.0
      %463 = vmatpush1.msra.mxu0 0.0
      %464 = vmatprep.subr.mxu0 0.0
      %465 = vmatpush1.msra.mxu0 0.0
      %466 = vmatprep.subr.mxu0 0.0
      %467 = vmatpush1.msra.mxu0 0.0
      %468 = vmatprep.subr.mxu0 0.0
      %469 = vmatpush1.msra.mxu0 0.0
      %470 = vmatprep.subr.mxu0 0.0
      %471 = vmatpush1.msra.mxu0 0.0
      %472 = vmatprep.subr.mxu0 0.0
      %473 = vmatpush1.msra.mxu0 0.0
      %474 = vmatprep.subr.mxu0 0.0
      %475 = vmatpush1.msra.mxu0 0.0
      %476 = vmatprep.subr.mxu0 0.0
      %477 = vmatpush1.msra.mxu0 0.0
      %478 = vmatprep.subr.mxu0 0.0
      %479 = vmatpush1.msra.mxu0 0.0
      %480 = vmatprep.subr.mxu0 0.0
      %481 = vmatpush1.msra.mxu0 0.0
      %482 = vmatprep.mubr.f32.mxu0 0.0
      %483 = vmatmul.mubr.f32.gmra.mrb[0].mxu0 %v416
      %v484 = vpop.f32.mrb[0].mxu0
      %v485 = vadd.f32 %v412, %v484
      %v486 = vpop.f32.mrb[0].mxu0
      %v487 = vadd.f32 %v412, %v486
      %488 = vdwg.mxu0
      %v489 = vmax.f32 %v485, 0.0
      %v490 = vmax.f32 %v487, 0.0
      %v491 = vld [vmem:[%s1] sm:$0x3]
      %v492 = vld [vmem:[%s2] sm:$0x3]
      %vm493 = vcmp.ge.f32.partialorder %v491, 1.0
      %vm494 = vcmp.le.f32.partialorder %v491, 16.0
      %vm495 = vmand %vm493, %vm494
      %vm496 = vcmp.ge.f32.partialorder %v492, 1.0
      %vm497 = vmand %vm495, %vm496
      %vm498 = vcmp.le.f32.partialorder %v492, 16.0
      %vm499 = vmand %vm497, %vm498
      %500 = vrot.lane.b32.xlu0 %v489, 17
      %v501 = vpop.permute.xlu0 %500
      %502 = vrot.lane.b32.xlu0 %v490, 17
      %v503 = vpop.permute.xlu0 %502
      %v504 = vlaneseq
      %v505 = vand.u32 %v504, 127
      %vm506 = vcmp.lt.s32.totalorder %v505, 17
      %v507 = vsel %vm506, %v501, %v503
      %v508 = vsel %vm506, %v503, %v501
      %v509 = vsel %vm499, 1, 0
      %v510 = vcvt.s32.f32 %v509
      %v512 = vlaneseq
      %v513 = vshrl.u32 %v512, 7
      %v514 = vsub.s32 0, %v513
      %v515 = vrot.slane %v510, %v514
      %v516 = vlaneseq
      %v517 = vshrl.u32 %v516, 7
      %v518 = vsub.s32 1, %v517
      %v519 = vrot.slane %v510, %v518
      %v522 = vmul.f32 %v508, %v515
      %v523 = vmul.f32 %v507, %v519
      %524 = vst [vmem:[#allocation2] sm:$0xf] %v522
      %525 = vst [vmem:[#allocation2 + $0x8] sm:$0xf] %v523
      %vm526 = vcmp.ge.f32.partialorder %v492, 0.0
      %vm527 = vmand %vm495, %vm526
      %vm528 = vcmp.le.f32.partialorder %v492, 15.0
      %vm529 = vmand %vm527, %vm528
      %530 = vrot.lane.b32.xlu0 %v489, 16
      %v531 = vpop.permute.xlu0 %530
      %532 = vrot.lane.b32.xlu0 %v490, 16
      %v533 = vpop.permute.xlu0 %532
      %vm534 = vcmp.lt.s32.totalorder %v505, 16
      %v535 = vsel %vm534, %v531, %v533
      %v536 = vsel %vm534, %v533, %v531
      %v537 = vsel %vm529, 1, 0
      %v538 = vcvt.s32.f32 %v537
      %v540 = vlaneseq
      %v541 = vshrl.u32 %v540, 7
      %v542 = vsub.s32 0, %v541
      %v543 = vrot.slane %v538, %v542
      %v544 = vlaneseq
      %v545 = vshrl.u32 %v544, 7
      %v546 = vsub.s32 1, %v545
      %v547 = vrot.slane %v538, %v546
      %v550 = vmul.f32 %v536, %v543
      %v551 = vmul.f32 %v535, %v547
      %v554 = vrot.slane %v550, 4
      %v555 = vrot.slane %v551, 4
      %558 = vst [vmem:[#allocation2] sm:$0xf0] %v554
      %559 = vst [vmem:[#allocation2 + $0x8] sm:$0xf0] %v555
      %vm560 = vcmp.ge.f32.partialorder %v492, -1.0
      %vm561 = vmand %vm495, %vm560
      %vm562 = vcmp.le.f32.partialorder %v492, 14.0
      %vm563 = vmand %vm561, %vm562
      %564 = vrot.lane.b32.xlu0 %v489, 15
      %v565 = vpop.permute.xlu0 %564
      %566 = vrot.lane.b32.xlu0 %v490, 15
      %v567 = vpop.permute.xlu0 %566
      %vm568 = vcmp.lt.s32.totalorder %v505, 15
      %v569 = vsel %vm568, %v565, %v567
      %v570 = vsel %vm568, %v567, %v565
      %v571 = vsel %vm563, 1, 0
      %v572 = vcvt.s32.f32 %v571
      %v574 = vlaneseq
      %v575 = vshrl.u32 %v574, 7
      %v576 = vsub.s32 0, %v575
      %v577 = vrot.slane %v572, %v576
      %v578 = vlaneseq
      %v579 = vshrl.u32 %v578, 7
      %v580 = vsub.s32 1, %v579
      %v581 = vrot.slane %v572, %v580
      %v584 = vmul.f32 %v570, %v577
      %v585 = vmul.f32 %v569, %v581
      %586 = vst [vmem:[#allocation2 + $0x10] sm:$0xf] %v584
      %587 = vst [vmem:[#allocation2 + $0x18] sm:$0xf] %v585
      %vm588 = vcmp.ge.f32.partialorder %v491, 0.0
      %vm589 = vcmp.le.f32.partialorder %v491, 15.0
      %vm590 = vmand %vm588, %vm589
      %vm591 = vmand %vm590, %vm496
      %vm592 = vmand %vm591, %vm498
      %593 = vrot.lane.b32.xlu0 %v489, 1
      %v594 = vpop.permute.xlu0 %593
      %595 = vrot.lane.b32.xlu0 %v490, 1
      %v596 = vpop.permute.xlu0 %595
      %vm597 = vcmp.lt.s32.totalorder %v505, 1
      %v598 = vsel %vm597, %v594, %v596
      %v599 = vsel %vm597, %v596, %v594
      %v600 = vsel %vm592, 1, 0
      %v601 = vcvt.s32.f32 %v600
      %v603 = vlaneseq
      %v604 = vshrl.u32 %v603, 7
      %v605 = vsub.s32 0, %v604
      %v606 = vrot.slane %v601, %v605
      %v607 = vlaneseq
      %v608 = vshrl.u32 %v607, 7
      %v609 = vsub.s32 1, %v608
      %v610 = vrot.slane %v601, %v609
      %v613 = vmul.f32 %v599, %v606
      %v614 = vmul.f32 %v598, %v610
      %v617 = vrot.slane %v613, 4
      %v618 = vrot.slane %v614, 4
      %621 = vst [vmem:[#allocation2 + $0x10] sm:$0xf0] %v617
      %622 = vst [vmem:[#allocation2 + $0x18] sm:$0xf0] %v618
      %623 = vst [vmem:[#allocation2 + $0x20] sm:$0xf] %v489
      %624 = vst [vmem:[#allocation2 + $0x28] sm:$0xf] %v490
      %vm625 = vmand %vm590, %vm560
      %vm626 = vmand %vm625, %vm562
      %627 = vrot.lane.b32.xlu0 %v489, 127
      %v628 = vpop.permute.xlu0 %627
      %629 = vrot.lane.b32.xlu0 %v490, 127
      %v630 = vpop.permute.xlu0 %629
      %vm631 = vcmp.lt.s32.totalorder %v505, 127
      %v632 = vsel %vm631, %v628, %v630
      %v633 = vsel %vm631, %v630, %v628
      %v634 = vsel %vm626, 1, 0
      %v635 = vcvt.s32.f32 %v634
      %v637 = vlaneseq
      %v638 = vshrl.u32 %v637, 7
      %v639 = vsub.s32 0, %v638
      %v640 = vrot.slane %v635, %v639
      %v641 = vlaneseq
      %v642 = vshrl.u32 %v641, 7
      %v643 = vsub.s32 1, %v642
      %v644 = vrot.slane %v635, %v643
      %v647 = vmul.f32 %v632, %v640
      %v648 = vmul.f32 %v633, %v644
      %v651 = vrot.slane %v647, 4
      %v652 = vrot.slane %v648, 4
      %655 = vst [vmem:[#allocation2 + $0x20] sm:$0xf0] %v651
      %656 = vst [vmem:[#allocation2 + $0x28] sm:$0xf0] %v652
      %vm657 = vcmp.ge.f32.partialorder %v491, -1.0
      %vm658 = vcmp.le.f32.partialorder %v491, 14.0
      %vm659 = vmand %vm657, %vm658
      %vm660 = vmand %vm659, %vm496
      %vm661 = vmand %vm660, %vm498
      %662 = vrot.lane.b32.xlu0 %v489, 113
      %v663 = vpop.permute.xlu0 %662
      %664 = vrot.lane.b32.xlu0 %v490, 113
      %v665 = vpop.permute.xlu0 %664
      %vm666 = vcmp.lt.s32.totalorder %v505, 113
      %v667 = vsel %vm666, %v663, %v665
      %v668 = vsel %vm666, %v665, %v663
      %v669 = vsel %vm661, 1, 0
      %v670 = vcvt.s32.f32 %v669
      %v672 = vlaneseq
      %v673 = vshrl.u32 %v672, 7
      %v674 = vsub.s32 0, %v673
      %v675 = vrot.slane %v670, %v674
      %v676 = vlaneseq
      %v677 = vshrl.u32 %v676, 7
      %v678 = vsub.s32 1, %v677
      %v679 = vrot.slane %v670, %v678
      %v682 = vmul.f32 %v667, %v675
      %v683 = vmul.f32 %v668, %v679
      %684 = vst [vmem:[#allocation2 + $0x30] sm:$0xf] %v682
      %685 = vst [vmem:[#allocation2 + $0x38] sm:$0xf] %v683
      %vm686 = vmand %vm659, %vm526
      %vm687 = vmand %vm686, %vm528
      %688 = vrot.lane.b32.xlu0 %v489, 112
      %v689 = vpop.permute.xlu0 %688
      %690 = vrot.lane.b32.xlu0 %v490, 112
      %v691 = vpop.permute.xlu0 %690
      %vm692 = vcmp.lt.s32.totalorder %v505, 112
      %v693 = vsel %vm692, %v689, %v691
      %v694 = vsel %vm692, %v691, %v689
      %v695 = vsel %vm687, 1, 0
      %v696 = vcvt.s32.f32 %v695
      %v698 = vlaneseq
      %v699 = vshrl.u32 %v698, 7
      %v700 = vsub.s32 0, %v699
      %v701 = vrot.slane %v696, %v700
      %v702 = vlaneseq
      %v703 = vshrl.u32 %v702, 7
      %v704 = vsub.s32 1, %v703
      %v705 = vrot.slane %v696, %v704
      %v708 = vmul.f32 %v693, %v701
      %v709 = vmul.f32 %v694, %v705
      %v712 = vrot.slane %v708, 4
      %v713 = vrot.slane %v709, 4
      %716 = vst [vmem:[#allocation2 + $0x30] sm:$0xf0] %v712
      %717 = vst [vmem:[#allocation2 + $0x38] sm:$0xf0] %v713
      %vm718 = vmand %vm659, %vm560
      %vm719 = vmand %vm718, %vm562
      %720 = vrot.lane.b32.xlu0 %v489, 111
      %v721 = vpop.permute.xlu0 %720
      %722 = vrot.lane.b32.xlu0 %v490, 111
      %v723 = vpop.permute.xlu0 %722
      %vm724 = vcmp.lt.s32.totalorder %v505, 111
      %v725 = vsel %vm724, %v721, %v723
      %v726 = vsel %vm724, %v723, %v721
      %v727 = vsel %vm719, 1, 0
      %v728 = vcvt.s32.f32 %v727
      %v730 = vlaneseq
      %v731 = vshrl.u32 %v730, 7
      %v732 = vsub.s32 0, %v731
      %v733 = vrot.slane %v728, %v732
      %v734 = vlaneseq
      %v735 = vshrl.u32 %v734, 7
      %v736 = vsub.s32 1, %v735
      %v737 = vrot.slane %v728, %v736
      %v740 = vmul.f32 %v725, %v733
      %v741 = vmul.f32 %v726, %v737
      %742 = vst [vmem:[#allocation2 + $0x40] sm:$0xf] %v740
      %743 = vst [vmem:[#allocation2 + $0x48] sm:$0xf] %v741
      %v744 = vld [vmem:[%s7] sm:$0xf]
      %v745 = vld [vmem:[#allocation2] sm:$0xff]
      %v746 = vld [vmem:[#allocation2 + $0x8] sm:$0xff]
      %v747 = vld [vmem:[#allocation2 + $0x10] sm:$0xff]
      %v748 = vld [vmem:[#allocation2 + $0x18] sm:$0xff]
      %v749 = vld [vmem:[#allocation2 + $0x20] sm:$0xff]
      %v750 = vld [vmem:[#allocation2 + $0x28] sm:$0xff]
      %v751 = vld [vmem:[#allocation2 + $0x30] sm:$0xff]
      %v752 = vld [vmem:[#allocation2 + $0x38] sm:$0xff]
      %v753 = vld [vmem:[#allocation2 + $0x40] sm:$0xf]
      %v754 = vld [vmem:[#allocation2 + $0x48] sm:$0xf]
      %v755 = vld [vmem:[%s8] sm:$0xf]
      %757 = vset.pattern.permute.xlu0 0
      %758 = vperm.xlu0 %757, %v755
      %v759 = vpop.permute.xlu0 %758
      %vm761 = vcmask 293888
      %v763 = vsel %vm761, %v744, 0
      %vm765 = vcmask 1043456
      %v767 = vsel %vm765, %v753, 0
      %v770 = vsel %vm765, %v754, 0
      %772 = vmatprep.subr.mxu0 %v746
      %773 = vmatpush1.msra.mxu0 %v745
      %774 = vmatprep.subr.mxu0 %v748
      %775 = vmatpush1.msra.mxu0 %v747
      %776 = vmatprep.subr.mxu0 %v750
      %777 = vmatpush1.msra.mxu0 %v749
      %778 = vmatprep.subr.mxu0 %v752
      %779 = vmatpush1.msra.mxu0 %v751
      %780 = vmatprep.subr.mxu0 %v770
      %781 = vmatpush1.msra.mxu0 %v767
      %782 = vmatprep.subr.mxu0 0.0
      %783 = vmatpush1.msra.mxu0 0.0
      %784 = vmatprep.subr.mxu0 0.0
      %785 = vmatpush1.msra.mxu0 0.0
      %786 = vmatprep.subr.mxu0 0.0
      %787 = vmatpush1.msra.mxu0 0.0
      %788 = vmatprep.subr.mxu0 0.0
      %789 = vmatpush1.msra.mxu0 0.0
      %790 = vmatprep.subr.mxu0 0.0
      %791 = vmatpush1.msra.mxu0 0.0
      %792 = vmatprep.subr.mxu0 0.0
      %793 = vmatpush1.msra.mxu0 0.0
      %794 = vmatprep.subr.mxu0 0.0
      %795 = vmatpush1.msra.mxu0 0.0
      %796 = vmatprep.subr.mxu0 0.0
      %797 = vmatpush1.msra.mxu0 0.0
      %798 = vmatprep.subr.mxu0 0.0
      %799 = vmatpush1.msra.mxu0 0.0
      %800 = vmatprep.subr.mxu0 0.0
      %801 = vmatpush1.msra.mxu0 0.0
      %802 = vmatprep.subr.mxu0 0.0
      %803 = vmatpush1.msra.mxu0 0.0
      %804 = vmatprep.subr.mxu0 0.0
      %805 = vmatpush1.msra.mxu0 0.0
      %806 = vmatprep.subr.mxu0 0.0
      %807 = vmatpush1.msra.mxu0 0.0
      %808 = vmatprep.subr.mxu0 0.0
      %809 = vmatpush1.msra.mxu0 0.0
      %810 = vmatprep.subr.mxu0 0.0
      %811 = vmatpush1.msra.mxu0 0.0
      %812 = vmatprep.subr.mxu0 0.0
      %813 = vmatpush1.msra.mxu0 0.0
      %814 = vmatprep.subr.mxu0 0.0
      %815 = vmatpush1.msra.mxu0 0.0
      %816 = vmatprep.subr.mxu0 0.0
      %817 = vmatpush1.msra.mxu0 0.0
      %818 = vmatprep.subr.mxu0 0.0
      %819 = vmatpush1.msra.mxu0 0.0
      %820 = vmatprep.subr.mxu0 0.0
      %821 = vmatpush1.msra.mxu0 0.0
      %822 = vmatprep.subr.mxu0 0.0
      %823 = vmatpush1.msra.mxu0 0.0
      %824 = vmatprep.subr.mxu0 0.0
      %825 = vmatpush1.msra.mxu0 0.0
      %826 = vmatprep.subr.mxu0 0.0
      %827 = vmatpush1.msra.mxu0 0.0
      %828 = vmatprep.subr.mxu0 0.0
      %829 = vmatpush1.msra.mxu0 0.0
      %830 = vmatprep.subr.mxu0 0.0
      %831 = vmatpush1.msra.mxu0 0.0
      %832 = vmatprep.subr.mxu0 0.0
      %833 = vmatpush1.msra.mxu0 0.0
      %834 = vmatprep.subr.mxu0 0.0
      %835 = vmatpush1.msra.mxu0 0.0
      %836 = vmatprep.mubr.f32.mxu0 0.0
      %837 = vmatmul.mubr.f32.gmra.mrb[0].mxu0 %v763
      %v838 = vpop.f32.mrb[0].mxu0
      %v839 = vadd.f32 %v759, %v838
      %v840 = vpop.f32.mrb[0].mxu0
      %v841 = vadd.f32 %v759, %v840
      %842 = vdwg.mxu0
      %v843 = vmax.f32 %v839, 0.0
      %v844 = vmax.f32 %v841, 0.0
      %v845 = vld [vmem:[%s9] sm:$0xff]
      %v846 = vld [vmem:[%s10] sm:$0xff]
      %848 = vset.pattern.permute.xlu0 0
      %849 = vperm.xlu0 %848, %v846
      %v850 = vpop.permute.xlu0 %849
      %vm852 = vcmask 31744
      %v854 = vsel %vm852, %v845, 0
      %v857 = vsel %vm765, %v843, 0
      %v860 = vsel %vm765, %v844, 0
      %862 = vmatprep.subr.mxu0 %v860
      %863 = vmatpush1.msra.mxu0 %v857
      %864 = vmatprep.subr.mxu0 0.0
      %865 = vmatpush1.msra.mxu0 0.0
      %866 = vmatprep.subr.mxu0 0.0
      %867 = vmatpush1.msra.mxu0 0.0
      %868 = vmatprep.subr.mxu0 0.0
      %869 = vmatpush1.msra.mxu0 0.0
      %870 = vmatprep.subr.mxu0 0.0
      %871 = vmatpush1.msra.mxu0 0.0
      %872 = vmatprep.subr.mxu0 0.0
      %873 = vmatpush1.msra.mxu0 0.0
      %874 = vmatprep.subr.mxu0 0.0
      %875 = vmatpush1.msra.mxu0 0.0
      %876 = vmatprep.subr.mxu0 0.0
      %877 = vmatpush1.msra.mxu0 0.0
      %878 = vmatprep.subr.mxu0 0.0
      %879 = vmatpush1.msra.mxu0 0.0
      %880 = vmatprep.subr.mxu0 0.0
      %881 = vmatpush1.msra.mxu0 0.0
      %882 = vmatprep.subr.mxu0 0.0
      %883 = vmatpush1.msra.mxu0 0.0
      %884 = vmatprep.subr.mxu0 0.0
      %885 = vmatpush1.msra.mxu0 0.0
      %886 = vmatprep.subr.mxu0 0.0
      %887 = vmatpush1.msra.mxu0 0.0
      %888 = vmatprep.subr.mxu0 0.0
      %889 = vmatpush1.msra.mxu0 0.0
      %890 = vmatprep.subr.mxu0 0.0
      %891 = vmatpush1.msra.mxu0 0.0
      %892 = vmatprep.subr.mxu0 0.0
      %893 = vmatpush1.msra.mxu0 0.0
      %894 = vmatprep.subr.mxu0 0.0
      %895 = vmatpush1.msra.mxu0 0.0
      %896 = vmatprep.subr.mxu0 0.0
      %897 = vmatpush1.msra.mxu0 0.0
      %898 = vmatprep.subr.mxu0 0.0
      %899 = vmatpush1.msra.mxu0 0.0
      %900 = vmatprep.subr.mxu0 0.0
      %901 = vmatpush1.msra.mxu0 0.0
      %902 = vmatprep.subr.mxu0 0.0
      %903 = vmatpush1.msra.mxu0 0.0
      %904 = vmatprep.subr.mxu0 0.0
      %905 = vmatpush1.msra.mxu0 0.0
      %906 = vmatprep.subr.mxu0 0.0
      %907 = vmatpush1.msra.mxu0 0.0
      %908 = vmatprep.subr.mxu0 0.0
      %909 = vmatpush1.msra.mxu0 0.0
      %910 = vmatprep.subr.mxu0 0.0
      %911 = vmatpush1.msra.mxu0 0.0
      %912 = vmatprep.subr.mxu0 0.0
      %913 = vmatpush1.msra.mxu0 0.0
      %914 = vmatprep.subr.mxu0 0.0
      %915 = vmatpush1.msra.mxu0 0.0
      %916 = vmatprep.subr.mxu0 0.0
      %917 = vmatpush1.msra.mxu0 0.0
      %918 = vmatprep.subr.mxu0 0.0
      %919 = vmatpush1.msra.mxu0 0.0
      %920 = vmatprep.subr.mxu0 0.0
      %921 = vmatpush1.msra.mxu0 0.0
      %922 = vmatprep.subr.mxu0 0.0
      %923 = vmatpush1.msra.mxu0 0.0
      %924 = vmatprep.subr.mxu0 0.0
      %925 = vmatpush1.msra.mxu0 0.0
      %926 = vmatprep.mubr.f32.mxu0 0.0
      %927 = vmatmul.mubr.f32.gmra.mrb[0].mxu0 %v854
      %v928 = vpop.f32.mrb[0].mxu0
      %v929 = vadd.f32 %v850, %v928
      %v930 = vpop.f32.mrb[0].mxu0
      %v931 = vadd.f32 %v850, %v930
      %932 = vdwg.mxu0
      %v933 = vld [vmem:[%s381] sm:$0xff]
      %v934 = vld [vmem:[%s381 + $0x8] sm:$0xff]
      %v935 = vadd.f32 %v929, %v933
      %v936 = vadd.f32 %v931, %v934
      %937 = vst [vmem:[%s386] sm:$0xff] %v935
      %938 = vst [vmem:[%s386 + $0x8] sm:$0xff] %v936
      %p939 = scmp.lt.s32.totalorder %s22, 1
      %s940 = scalar_select %p939, %s22, 1
      %s941 = smul.addr %s940, 2
      %s942 = smul.addr %s941, 8
      %s943 = scalar_lea.vmem %s11, %s942
      // Predicated region
      $region65: #{bottleneck_forward.1} parent=63 // pred_check
        %p944 = pneg %p276
      $region66: #{bottleneck_forward.1} parent=63 // pred_check_branch
        %946 = sbr.rel (%p944) target = $region68
      $region67: #{bottleneck_forward.1} parent=63 // pred_region
        _
      $region68: #{bottleneck_forward.1} parent=63 // pred_fallthru
        _
    $region64: #{bottleneck_forward.1} parent=5 // pred_fallthru
      _
    %p947 = scmp.le.s32.totalorder 2, %s17
    // Predicated region
    $region69: #{bottleneck_forward.1} parent=5 // pred_check
      %p948 = pneg %p947
    $region70: #{bottleneck_forward.1} parent=5 // pred_check_branch
      %950 = sbr.rel (%p948) target = $region72
    $region71: #{bottleneck_forward.1} parent=5 // pred_region
      %s951 = ssub.s32 %s17, 2
      // Predicated region
      $region73: #{bottleneck_forward.1} parent=71 // pred_check
        %p952 = pneg %p282
      $region74: #{bottleneck_forward.1} parent=71 // pred_check_branch
        %954 = sbr.rel (%p952) target = $region76
      $region75: #{bottleneck_forward.1} parent=71 // pred_region
        %p955 = scmp.lt.s32.totalorder %s23, 1
        %s956 = scalar_select %p955, %s23, 1
        %s957 = smul.addr %s956, 2
        %s958 = smul.addr %s957, 8
        %s959 = scalar_lea.vmem %s11, %s958
      $region76: #{bottleneck_forward.1} parent=71 // pred_fallthru
        _
    $region72: #{bottleneck_forward.1} parent=5 // pred_fallthru
      _
  $region6: #{bottleneck_forward.1} parent=0 // loop_footer
    %s21 = sadd.s32 1, %s17
  $region7: #{bottleneck_forward.1} parent=0 // loop_footer_branch
    %16 = sbr.rel target = $region3
  $region8: #{bottleneck_forward.1} parent=0 // loop_exit
    _

</llo_original>
